<compile_context>
chip_gen: v7x
topology: tpu7x:2x2x1
jax: 0.10.0
libtpu: 0.0.40
codegen_flags: <defaults>
</compile_context>

<pallas_src>
import functools

import jax
import jax.numpy as jnp
from jax.experimental import pallas as pl
from jax.experimental.pallas import tpu as pltpu


def _make_kernel(n_inputs):
    """Kernel over one batch tile: fusion linear (+bias) then SE gating."""

    def kernel(*refs):
        x_refs = refs[:n_inputs]
        wf_refs = refs[n_inputs:2 * n_inputs]
        bf_ref, wsq_ref, wex_ref, o_ref = refs[2 * n_inputs:]

        # fusion: emb = sum_i x_i @ wf_i + bf   (concat fused into split matmuls)
        emb = jnp.dot(x_refs[0][...], wf_refs[0][...],
                      preferred_element_type=jnp.float32)
        for x_ref, w_ref in zip(x_refs[1:], wf_refs[1:]):
            emb = emb + jnp.dot(x_ref[...], w_ref[...],
                                preferred_element_type=jnp.float32)
        emb = emb + bf_ref[...]                       # (1, H) broadcast over rows

        # SENet: squeeze -> relu -> excitation -> sigmoid -> scale
        g = jnp.dot(emb, wsq_ref[...], preferred_element_type=jnp.float32)
        g = jnp.maximum(g, 0.0)
        g = jnp.dot(g, wex_ref[...], preferred_element_type=jnp.float32)
        g = jax.nn.sigmoid(g)

        o_ref[...] = (emb * g).astype(o_ref.dtype)

    return kernel


def _round_up(x, m):
    return ((x + m - 1) // m) * m


def _auto_block_b(batch):
    """Multiple-of-8 batch tile, targeting >= 2 grid steps and <= 512 rows."""
    b8 = _round_up(batch, 8)
    if b8 <= 8:
        return 8
    return max(8, min(512, _round_up(b8 // 2, 8)))


@functools.partial(jax.jit, static_argnames=("block_b",))
def concat_dense_se(inputs, wf, bf, wsq, wex, *, block_b=None):
    """inputs: tuple of (B, Mi) arrays; weights stored as (in, out)."""
    inputs = tuple(inputs)
    n = len(inputs)
    B = inputs[0].shape[0]
    H = wf.shape[1]
    R = wsq.shape[1]
    out_dtype = inputs[0].dtype

    # --- batch tiling (pad tail tile with zero rows; sliced off at the end) ---
    tb = _auto_block_b(B) if block_b is None else max(8, _round_up(block_b, 8))
    Bp = _round_up(max(B, tb), tb)
    grid = (Bp // tb,)

    xs = [jnp.pad(x, ((0, Bp - B), (0, 0))) if Bp != B else x for x in inputs]

    # --- split fusion weight into per-modality row blocks (concat fused away) ---
    # TODO(synk): pre-split / pre-pad the weights once outside jit in production
    # so they are not re-sliced on every call.
    wfs, off = [], 0
    for x in inputs:
        m = x.shape[1]
        wfs.append(wf[off:off + m, :])
        off += m
    bf2 = bf.reshape(1, H)

    # --- pad squeeze dim to a multiple of 128 lanes (zero pad is an exact no-op) ---
    Rp = _round_up(R, 128)
    if Rp != R:
        wsq = jnp.pad(wsq, ((0, 0), (0, Rp - R)))
        wex = jnp.pad(wex, ((0, Rp - R), (0, 0)))

    in_specs = (
        [pl.BlockSpec((tb, x.shape[1]), lambda i: (i, 0)) for x in xs]       # x tiles
        + [pl.BlockSpec((w.shape[0], H), lambda i: (0, 0)) for w in wfs]     # wf blocks
        + [pl.BlockSpec((1, H), lambda i: (0, 0)),                           # bias
           pl.BlockSpec((H, Rp), lambda i: (0, 0)),                          # squeeze
           pl.BlockSpec((Rp, H), lambda i: (0, 0))]                          # excitation
    )

    out = pl.pallas_call(
        _make_kernel(n),
        out_shape=jax.ShapeDtypeStruct((Bp, H), out_dtype),
        grid_spec=pltpu.PrefetchScalarGridSpec(
            num_scalar_prefetch=0,
            grid=grid,
            in_specs=in_specs,
            out_specs=pl.BlockSpec((tb, H), lambda i: (i, 0)),
        ),
        compiler_params=pltpu.CompilerParams(
            dimension_semantics=("parallel",),
            vmem_limit_bytes=64 * 1024 * 1024,
        ),
    )(*xs, *wfs, bf2, wsq, wex)

    return out[:B] if Bp != B else out


def _init_params(key, multimodal_hidden_size, hidden_size, se_ratio, dtype=jnp.float32):
    """Deterministic synthetic parameters matching the PyTorch module's shapes."""
    k1, k2, k3, k4 = jax.random.split(key, 4)
    squeeze = hidden_size // se_ratio
    # PyTorch Linear stores weight as (out, in); we keep (in, out) for x @ W.
    wf = jax.random.normal(k1, (multimodal_hidden_size, hidden_size), dtype) * 0.05
    bf = jax.random.normal(k2, (hidden_size,), dtype) * 0.05
    wsq = jax.random.normal(k3, (hidden_size, squeeze), dtype) * 0.05
    wex = jax.random.normal(k4, (squeeze, hidden_size), dtype) * 0.05
    return wf, bf, wsq, wex


def _reference(inputs, wf, bf, wsq, wex):
    x = jnp.concatenate(inputs, axis=1)
    emb = x @ wf + bf
    g = jax.nn.sigmoid(jnp.maximum(emb @ wsq, 0.0) @ wex)
    return emb * g


if __name__ == "__main__":
    # small shapes consistent with the module: two modality embeddings of width 32
    B = 256                                     # -> auto tile 128, grid of 2
    M1, M2 = 32, 32
    multimodal_hidden_size = M1 + M2            # 64
    hidden_size = 32
    se_ratio = 8                                # squeeze dim = 4 (padded to 128)
    # dropout = 0.1 -> inference-mode identity (no-op)

    key = jax.random.PRNGKey(0)
    kx1, kx2, kp = jax.random.split(key, 3)
    x1 = jax.random.normal(kx1, (B, M1), jnp.float32)
    x2 = jax.random.normal(kx2, (B, M2), jnp.float32)

    wf, bf, wsq, wex = _init_params(kp, multimodal_hidden_size, hidden_size, se_ratio)

    out = concat_dense_se((x1, x2), wf, bf, wsq, wex)
    out = jax.block_until_ready(out)

    ref = _reference((x1, x2), wf, bf, wsq, wex)
    assert out.shape == (B, hidden_size)
    assert jnp.allclose(out, ref, atol=1e-4, rtol=1e-4), float(jnp.max(jnp.abs(out - ref)))

    print("KERNEL_OK")
</pallas_src>

<mosaic_0001>
module attributes {stable_mosaic.version = 11 : i64} {
  func.func @kernel(%arg0: i32, %arg1: memref<128x32xf32, #tpu.memory_space<vmem>>, %arg2: memref<128x32xf32, #tpu.memory_space<vmem>>, %arg3: memref<32x32xf32, #tpu.memory_space<vmem>>, %arg4: memref<32x32xf32, #tpu.memory_space<vmem>>, %arg5: memref<1x32xf32, #tpu.memory_space<vmem>>, %arg6: memref<32x128xf32, #tpu.memory_space<vmem>>, %arg7: memref<128x32xf32, #tpu.memory_space<vmem>>, %arg8: memref<128x32xf32, #tpu.memory_space<vmem>>) attributes {dimension_semantics = [#tpu.dimension_semantics<parallel>], iteration_bounds = array<i64: 2>, scalar_prefetch = 0 : i64, scratch_operands = 0 : i64, tpu.core_type = #tpu.core_type<tc>, window_params = [{transform_indices = @transform_0, window_bounds = array<i64: 128, 32>}, {transform_indices = @transform_1, window_bounds = array<i64: 128, 32>}, {pipeline_mode = #tpu.pipeline_mode<synchronous>, transform_indices = @transform_2, window_bounds = array<i64: 32, 32>}, {pipeline_mode = #tpu.pipeline_mode<synchronous>, transform_indices = @transform_3, window_bounds = array<i64: 32, 32>}, {pipeline_mode = #tpu.pipeline_mode<synchronous>, transform_indices = @transform_4, window_bounds = array<i64: 1, 32>}, {pipeline_mode = #tpu.pipeline_mode<synchronous>, transform_indices = @transform_5, window_bounds = array<i64: 32, 128>}, {pipeline_mode = #tpu.pipeline_mode<synchronous>, transform_indices = @transform_6, window_bounds = array<i64: 128, 32>}, {transform_indices = @transform_7, window_bounds = array<i64: 128, 32>}]} {
    %c0 = arith.constant 0 : index
    %c0_0 = arith.constant 0 : index
    %0 = vector.load %arg1[%c0, %c0_0] : memref<128x32xf32, #tpu.memory_space<vmem>>, vector<128x32xf32>
    %c0_1 = arith.constant 0 : index
    %c0_2 = arith.constant 0 : index
    %1 = vector.load %arg3[%c0_1, %c0_2] : memref<32x32xf32, #tpu.memory_space<vmem>>, vector<32x32xf32>
    %cst = arith.constant dense<0.000000e+00> : vector<128x32xf32>
    %2 = tpu.matmul %0, %1, %cst {dimension_numbers = #tpu.dot_dimension_numbers<[1], [0], [0], [1], [0, 0, 1, 1], [], []>} : vector<128x32xf32>, vector<32x32xf32>, vector<128x32xf32> -> vector<128x32xf32>
    %c0_3 = arith.constant 0 : index
    %c0_4 = arith.constant 0 : index
    %3 = vector.load %arg2[%c0_3, %c0_4] : memref<128x32xf32, #tpu.memory_space<vmem>>, vector<128x32xf32>
    %c0_5 = arith.constant 0 : index
    %c0_6 = arith.constant 0 : index
    %4 = vector.load %arg4[%c0_5, %c0_6] : memref<32x32xf32, #tpu.memory_space<vmem>>, vector<32x32xf32>
    %cst_7 = arith.constant dense<0.000000e+00> : vector<128x32xf32>
    %5 = tpu.matmul %3, %4, %cst_7 {dimension_numbers = #tpu.dot_dimension_numbers<[1], [0], [0], [1], [0, 0, 1, 1], [], []>} : vector<128x32xf32>, vector<32x32xf32>, vector<128x32xf32> -> vector<128x32xf32>
    %6 = arith.addf %2, %5 : vector<128x32xf32>
    %c0_8 = arith.constant 0 : index
    %c0_9 = arith.constant 0 : index
    %7 = vector.load %arg5[%c0_8, %c0_9] : memref<1x32xf32, #tpu.memory_space<vmem>>, vector<1x32xf32>
    %8 = vector.broadcast %7 : vector<1x32xf32> to vector<128x32xf32>
    %9 = arith.addf %6, %8 : vector<128x32xf32>
    %c0_10 = arith.constant 0 : index
    %c0_11 = arith.constant 0 : index
    %10 = vector.load %arg6[%c0_10, %c0_11] : memref<32x128xf32, #tpu.memory_space<vmem>>, vector<32x128xf32>
    %cst_12 = arith.constant dense<0.000000e+00> : vector<128x128xf32>
    %11 = tpu.matmul %9, %10, %cst_12 {dimension_numbers = #tpu.dot_dimension_numbers<[1], [0], [0], [1], [0, 0, 1, 1], [], []>} : vector<128x32xf32>, vector<32x128xf32>, vector<128x128xf32> -> vector<128x128xf32>
    %cst_13 = arith.constant 0.000000e+00 : f32
    %12 = vector.broadcast %cst_13 : f32 to vector<128x128xf32>
    %13 = arith.maximumf %11, %12 : vector<128x128xf32>
    %c0_14 = arith.constant 0 : index
    %c0_15 = arith.constant 0 : index
    %14 = vector.load %arg7[%c0_14, %c0_15] : memref<128x32xf32, #tpu.memory_space<vmem>>, vector<128x32xf32>
    %cst_16 = arith.constant dense<0.000000e+00> : vector<128x32xf32>
    %15 = tpu.matmul %13, %14, %cst_16 {dimension_numbers = #tpu.dot_dimension_numbers<[1], [0], [0], [1], [0, 0, 1, 1], [], []>} : vector<128x128xf32>, vector<128x32xf32>, vector<128x32xf32> -> vector<128x32xf32>
    %16 = arith.negf %15 : vector<128x32xf32>
    %17 = math.exp %16 : vector<128x32xf32>
    %cst_17 = arith.constant 1.000000e+00 : f32
    %18 = vector.broadcast %cst_17 : f32 to vector<128x32xf32>
    %19 = arith.addf %18, %17 : vector<128x32xf32>
    %20 = arith.divf %18, %19 : vector<128x32xf32>
    %21 = arith.mulf %9, %20 : vector<128x32xf32>
    %c0_18 = arith.constant 0 : index
    %c0_19 = arith.constant 0 : index
    %22 = vector.load %arg8[%c0_18, %c0_19] : memref<128x32xf32, #tpu.memory_space<vmem>>, vector<128x32xf32>
    tpu.vector_store %arg8[%c0_18, %c0_19], %21 {strides = array<i32>} : memref<128x32xf32, #tpu.memory_space<vmem>>, vector<128x32xf32>,
    return
  }
  func.func @transform_0(%arg0: i32) -> (i32, i32) {
    %c0_i32 = arith.constant 0 : i32
    %c0_i32_0 = arith.constant 0 : i32
    return %arg0, %c0_i32 : i32, i32
  }
  func.func @transform_1(%arg0: i32) -> (i32, i32) {
    %c0_i32 = arith.constant 0 : i32
    %c0_i32_0 = arith.constant 0 : i32
    return %arg0, %c0_i32 : i32, i32
  }
  func.func @transform_2(%arg0: i32) -> (i32, i32) {
    %c0_i32 = arith.constant 0 : i32
    %c0_i32_0 = arith.constant 0 : i32
    %c0_i32_1 = arith.constant 0 : i32
    return %c0_i32, %c0_i32_0 : i32, i32
  }
  func.func @transform_3(%arg0: i32) -> (i32, i32) {
    %c0_i32 = arith.constant 0 : i32
    %c0_i32_0 = arith.constant 0 : i32
    %c0_i32_1 = arith.constant 0 : i32
    return %c0_i32, %c0_i32_0 : i32, i32
  }
  func.func @transform_4(%arg0: i32) -> (i32, i32) {
    %c0_i32 = arith.constant 0 : i32
    %c0_i32_0 = arith.constant 0 : i32
    %c0_i32_1 = arith.constant 0 : i32
    return %c0_i32, %c0_i32_0 : i32, i32
  }
  func.func @transform_5(%arg0: i32) -> (i32, i32) {
    %c0_i32 = arith.constant 0 : i32
    %c0_i32_0 = arith.constant 0 : i32
    %c0_i32_1 = arith.constant 0 : i32
    return %c0_i32, %c0_i32_0 : i32, i32
  }
  func.func @transform_6(%arg0: i32) -> (i32, i32) {
    %c0_i32 = arith.constant 0 : i32
    %c0_i32_0 = arith.constant 0 : i32
    %c0_i32_1 = arith.constant 0 : i32
    return %c0_i32, %c0_i32_0 : i32, i32
  }
  func.func @transform_7(%arg0: i32) -> (i32, i32) {
    %c0_i32 = arith.constant 0 : i32
    %c0_i32_0 = arith.constant 0 : i32
    return %arg0, %c0_i32 : i32, i32
  }
}

</mosaic_0001>

<llo_original>
// kernel: concat_dense_se.1
$region0: #{concat_dense_se.1}
  #allocation0 [shape = 'u32[]', space=smem, size = 0x4, offset = 0x4, fixed_abs, tag = 'smem constant byte address 0x4 - core index']
  #allocation1 [shape = 'u32[144,128]{1,0:T(1,128)}', space=vmem, size = 0x12000, scoped, tag = 'internal scratch']
  %s0 = inlined_call_operand.hbm [shape: f32[256,32], index: 0, kind: input, shape index: {}]
  %s1 = inlined_call_operand.hbm [shape: f32[256,32], index: 1, kind: input, shape index: {}]
  %s2 = inlined_call_operand.hbm [shape: f32[32,32], index: 2, kind: input, shape index: {}]
  %s3 = inlined_call_operand.hbm [shape: f32[32,32], index: 3, kind: input, shape index: {}]
  %s4 = inlined_call_operand.hbm [shape: f32[1,32], index: 4, kind: input, shape index: {}]
  %s5 = inlined_call_operand.hbm [shape: f32[32,128], index: 5, kind: input, shape index: {}]
  %s6 = inlined_call_operand.hbm [shape: f32[128,32], index: 6, kind: input, shape index: {}]
  %s7 = inlined_call_operand.hbm [shape: f32[256,32], index: 7, kind: output, shape index: {}]
  %s8 = sld [smem:[#allocation0]]
  $region89: #{concat_dense_se.1} parent=0
    _
  %s10 = ssub.s32 1, %s8
  %s11 = scalar_select 0, %s10, %s8
  $region1: #{concat_dense_se.1} parent=0
    #allocation2 [shape = 'u8[131072]{0}', space=vmem, size = 0x20000, scoped, tag = 'input window, operand 0']
    #allocation3 [shape = 's32[2]{0}', space=sflag, size = 0x8, scoped, tag = 'scoped memory for concat_dense_se.1']
    #allocation4 [shape = 's32[2]{0}', space=sflag, size = 0x8, scoped, tag = 'scoped memory for concat_dense_se.1']
    #allocation5 [shape = 'u8[131072]{0}', space=vmem, size = 0x20000, scoped, tag = 'input window, operand 1']
    #allocation6 [shape = 's32[2]{0}', space=sflag, size = 0x8, scoped, tag = 'scoped memory for concat_dense_se.1']
    #allocation7 [shape = 'u8[16384]{0}', space=vmem, size = 0x4000, scoped, tag = 'input window, operand 2, single buffered']
    #allocation8 [shape = 'u8[16384]{0}', space=vmem, size = 0x4000, scoped, tag = 'input window, operand 3, single buffered']
    #allocation9 [shape = 's32[1]{0}', space=sflag, size = 0x4, scoped, tag = 'scoped memory for concat_dense_se.1']
    #allocation10 [shape = 'u8[512]{0}', space=vmem, size = 0x400, scoped, tag = 'input window, operand 4, single buffered']
    #allocation11 [shape = 'u8[16384]{0}', space=vmem, size = 0x4000, scoped, tag = 'input window, operand 5, single buffered']
    #allocation12 [shape = 's32[1]{0}', space=sflag, size = 0x4, scoped, tag = 'scoped memory for concat_dense_se.1']
    #allocation13 [shape = 'u8[65536]{0}', space=vmem, size = 0x10000, scoped, tag = 'input window, operand 6, single buffered']
    #allocation14 [shape = 'u8[131072]{0}', space=vmem, size = 0x20000, scoped, tag = 'output window, operand 0']
    %12 = vsyncpa [#allocation3], 0
    %s13 = scalar_lea.sflag [#allocation3], 1
    %14 = vsyncpa %s13, 0
    %15 = vsyncpa [#allocation6], 0
    %s16 = scalar_lea.sflag [#allocation6], 1
    %17 = vsyncpa %s16, 0
    %18 = vsyncpa [#allocation9], 0
    %19 = vsyncpa [#allocation12], 0
    %20 = vsyncpa [#allocation4], 0
    %s21 = scalar_lea.sflag [#allocation4], 1
    %22 = vsyncpa %s21, 0
    loop: start=0, step=1, limit=4
    $region2: #{concat_dense_se.1} parent=1 // loop_pre_header
      _
    $region3: #{concat_dense_se.1} parent=1 // loop_header
      %s24 = sphi 0, %s28
      %p25 = scmp.ge.s32.totalorder %s24, 4
      %s34 = sphi 0, %s36
      %s37 = sphi 0, %s34
      %s38 = sphi 0, %s37
      %s54 = sphi 0, %s38
      %s60 = sphi 0, %s62
      %s63 = sphi 0, %s60
      %s64 = sphi 0, %s63
      %s80 = sphi 0, %s64
      %s84 = sphi 0, %s84
      %s86 = sphi 0, %s84
      %s87 = sphi 0, %s86
      %s101 = sphi 0, %s87
      %s105 = sphi 0, %s105
      %s107 = sphi 0, %s105
      %s108 = sphi 0, %s107
      %s122 = sphi 0, %s108
      %s126 = sphi 0, %s126
      %s128 = sphi 0, %s126
      %s129 = sphi 0, %s128
      %s143 = sphi 0, %s129
      %s147 = sphi 0, %s147
      %s149 = sphi 0, %s147
      %s150 = sphi 0, %s149
      %s164 = sphi 0, %s150
      %s168 = sphi 0, %s168
      %s170 = sphi 0, %s168
      %s171 = sphi 0, %s170
      %s185 = sphi 0, %s171
      %s191 = sphi 0, %s193
      %s194 = sphi 0, %s191
      %s195 = sphi 0, %s194
      %s211 = sphi 0, %s195
    $region4: #{concat_dense_se.1} parent=1 // loop_header_branch
      %27 = sbr.rel (%p25) target = $region8
    $region5: #{concat_dense_se.1} parent=1 // loop_body
      %s29 = ssub.s32 %s24, 1
      %s30 = ssub.s32 %s24, 2
      %s31 = sadd.s32 %s24, 1
      %s32 = ssub.s32 %s24, %s31
      %p33 = scmp.eq.s32.totalorder %s32, 0
      %s35 = sadd.s32 %s34, 1
      %s36 = scalar_select %p33, %s34, %s35
      %p39 = pneg %p33
      %p40 = scmp.eq.s32.totalorder %s24, 1
      %p41 = por %p39, %p40
      %p42 = scmp.ne.s32.totalorder %s34, %s37
      %p43 = scmp.eq.s32.totalorder %s24, 0
      %p44 = por %p42, %p43
      %p45 = scmp.ne.s32.totalorder %s34, %s37
      %p46 = scmp.eq.s32.totalorder %s29, 1
      %p47 = por %p45, %p46
      %p48 = scmp.ne.s32.totalorder %s37, %s38
      %p49 = scmp.eq.s32.totalorder %s29, 0
      %p50 = por %p48, %p49
      %p51 = scmp.ne.s32.totalorder %s37, %s38
      %p52 = scmp.eq.s32.totalorder %s30, 1
      %p53 = por %p51, %p52
      %p55 = scmp.ne.s32.totalorder %s38, %s54
      %p56 = scmp.eq.s32.totalorder %s30, 0
      %p57 = por %p55, %p56
      %s58 = ssub.s32 %s24, %s31
      %p59 = scmp.eq.s32.totalorder %s58, 0
      %s61 = sadd.s32 %s60, 1
      %s62 = scalar_select %p59, %s60, %s61
      %p65 = pneg %p59
      %p66 = scmp.eq.s32.totalorder %s24, 1
      %p67 = por %p65, %p66
      %p68 = scmp.ne.s32.totalorder %s60, %s63
      %p69 = scmp.eq.s32.totalorder %s24, 0
      %p70 = por %p68, %p69
      %p71 = scmp.ne.s32.totalorder %s60, %s63
      %p72 = scmp.eq.s32.totalorder %s29, 1
      %p73 = por %p71, %p72
      %p74 = scmp.ne.s32.totalorder %s63, %s64
      %p75 = scmp.eq.s32.totalorder %s29, 0
      %p76 = por %p74, %p75
      %p77 = scmp.ne.s32.totalorder %s63, %s64
      %p78 = scmp.eq.s32.totalorder %s30, 1
      %p79 = por %p77, %p78
      %p81 = scmp.ne.s32.totalorder %s64, %s80
      %p82 = scmp.eq.s32.totalorder %s30, 0
      %p83 = por %p81, %p82
      %s85 = sadd.s32 %s84, 1
      %p88 = scmp.eq.s32.totalorder %s24, 1
      %p89 = scmp.ne.s32.totalorder %s84, %s86
      %p90 = scmp.eq.s32.totalorder %s24, 0
      %p91 = por %p89, %p90
      %p92 = scmp.ne.s32.totalorder %s84, %s86
      %p93 = scmp.eq.s32.totalorder %s29, 1
      %p94 = por %p92, %p93
      %p95 = scmp.ne.s32.totalorder %s86, %s87
      %p96 = scmp.eq.s32.totalorder %s29, 0
      %p97 = por %p95, %p96
      %p98 = scmp.ne.s32.totalorder %s86, %s87
      %p99 = scmp.eq.s32.totalorder %s30, 1
      %p100 = por %p98, %p99
      %p102 = scmp.ne.s32.totalorder %s87, %s101
      %p103 = scmp.eq.s32.totalorder %s30, 0
      %p104 = por %p102, %p103
      %s106 = sadd.s32 %s105, 1
      %p109 = scmp.eq.s32.totalorder %s24, 1
      %p110 = scmp.ne.s32.totalorder %s105, %s107
      %p111 = scmp.eq.s32.totalorder %s24, 0
      %p112 = por %p110, %p111
      %p113 = scmp.ne.s32.totalorder %s105, %s107
      %p114 = scmp.eq.s32.totalorder %s29, 1
      %p115 = por %p113, %p114
      %p116 = scmp.ne.s32.totalorder %s107, %s108
      %p117 = scmp.eq.s32.totalorder %s29, 0
      %p118 = por %p116, %p117
      %p119 = scmp.ne.s32.totalorder %s107, %s108
      %p120 = scmp.eq.s32.totalorder %s30, 1
      %p121 = por %p119, %p120
      %p123 = scmp.ne.s32.totalorder %s108, %s122
      %p124 = scmp.eq.s32.totalorder %s30, 0
      %p125 = por %p123, %p124
      %s127 = sadd.s32 %s126, 1
      %p130 = scmp.eq.s32.totalorder %s24, 1
      %p131 = scmp.ne.s32.totalorder %s126, %s128
      %p132 = scmp.eq.s32.totalorder %s24, 0
      %p133 = por %p131, %p132
      %p134 = scmp.ne.s32.totalorder %s126, %s128
      %p135 = scmp.eq.s32.totalorder %s29, 1
      %p136 = por %p134, %p135
      %p137 = scmp.ne.s32.totalorder %s128, %s129
      %p138 = scmp.eq.s32.totalorder %s29, 0
      %p139 = por %p137, %p138
      %p140 = scmp.ne.s32.totalorder %s128, %s129
      %p141 = scmp.eq.s32.totalorder %s30, 1
      %p142 = por %p140, %p141
      %p144 = scmp.ne.s32.totalorder %s129, %s143
      %p145 = scmp.eq.s32.totalorder %s30, 0
      %p146 = por %p144, %p145
      %s148 = sadd.s32 %s147, 1
      %p151 = scmp.eq.s32.totalorder %s24, 1
      %p152 = scmp.ne.s32.totalorder %s147, %s149
      %p153 = scmp.eq.s32.totalorder %s24, 0
      %p154 = por %p152, %p153
      %p155 = scmp.ne.s32.totalorder %s147, %s149
      %p156 = scmp.eq.s32.totalorder %s29, 1
      %p157 = por %p155, %p156
      %p158 = scmp.ne.s32.totalorder %s149, %s150
      %p159 = scmp.eq.s32.totalorder %s29, 0
      %p160 = por %p158, %p159
      %p161 = scmp.ne.s32.totalorder %s149, %s150
      %p162 = scmp.eq.s32.totalorder %s30, 1
      %p163 = por %p161, %p162
      %p165 = scmp.ne.s32.totalorder %s150, %s164
      %p166 = scmp.eq.s32.totalorder %s30, 0
      %p167 = por %p165, %p166
      %s169 = sadd.s32 %s168, 1
      %p172 = scmp.eq.s32.totalorder %s24, 1
      %p173 = scmp.ne.s32.totalorder %s168, %s170
      %p174 = scmp.eq.s32.totalorder %s24, 0
      %p175 = por %p173, %p174
      %p176 = scmp.ne.s32.totalorder %s168, %s170
      %p177 = scmp.eq.s32.totalorder %s29, 1
      %p178 = por %p176, %p177
      %p179 = scmp.ne.s32.totalorder %s170, %s171
      %p180 = scmp.eq.s32.totalorder %s29, 0
      %p181 = por %p179, %p180
      %p182 = scmp.ne.s32.totalorder %s170, %s171
      %p183 = scmp.eq.s32.totalorder %s30, 1
      %p184 = por %p182, %p183
      %p186 = scmp.ne.s32.totalorder %s171, %s185
      %p187 = scmp.eq.s32.totalorder %s30, 0
      %p188 = por %p186, %p187
      %s189 = ssub.s32 %s24, %s31
      %p190 = scmp.eq.s32.totalorder %s189, 0
      %s192 = sadd.s32 %s191, 1
      %s193 = scalar_select %p190, %s191, %s192
      %p196 = pneg %p190
      %p197 = scmp.eq.s32.totalorder %s24, 1
      %p198 = por %p196, %p197
      %p199 = scmp.ne.s32.totalorder %s191, %s194
      %p200 = scmp.eq.s32.totalorder %s24, 0
      %p201 = por %p199, %p200
      %p202 = scmp.ne.s32.totalorder %s191, %s194
      %p203 = scmp.eq.s32.totalorder %s29, 1
      %p204 = por %p202, %p203
      %p205 = scmp.ne.s32.totalorder %s194, %s195
      %p206 = scmp.eq.s32.totalorder %s29, 0
      %p207 = por %p205, %p206
      %p208 = scmp.ne.s32.totalorder %s194, %s195
      %p209 = scmp.eq.s32.totalorder %s30, 1
      %p210 = por %p208, %p209
      %p212 = scmp.ne.s32.totalorder %s195, %s211
      %p213 = scmp.eq.s32.totalorder %s30, 0
      %p214 = por %p212, %p213
      %p215 = scmp.le.s32.totalorder 1, %s24
      %p216 = scmp.lt.s32.totalorder %s24, 3
      %p217 = pnand %p215, %p216
      %p218 = pneg %p217
      // Predicated region
      $region9: #{concat_dense_se.1} parent=5 // pred_check
        _
      $region10: #{concat_dense_se.1} parent=5 // pred_check_branch
        %220 = sbr.rel (%p217) target = $region12
      $region11: #{concat_dense_se.1} parent=5 // pred_region
        %s221 = ssub.s32 %s24, 1
        // Predicated region
        $region13: #{concat_dense_se.1} parent=11 // pred_check
          %p222 = pneg %p97
        $region14: #{concat_dense_se.1} parent=11 // pred_check_branch
          %224 = sbr.rel (%p222) target = $region16
        $region15: #{concat_dense_se.1} parent=11 // pred_region
          %s226 = ssub.s32 512, 512
          %227 = vsyncadd [#allocation6], %s226
          %s228 = sshll.u32 [#allocation7], 4
          %s229 = int_to_ptr.vmem [resolvable:$true] %s228
          %234 = dma.hbm_to_vmem [thread:$0]  %s2, 512, %s229, [#allocation6], 128, 128, 8
        $region16: #{concat_dense_se.1} parent=11 // pred_fallthru
          _
        // Predicated region
        $region17: #{concat_dense_se.1} parent=11 // pred_check
          %p235 = pneg %p118
        $region18: #{concat_dense_se.1} parent=11 // pred_check_branch
          %237 = sbr.rel (%p235) target = $region20
        $region19: #{concat_dense_se.1} parent=11 // pred_region
          %s239 = ssub.s32 512, 512
          %240 = vsyncadd [#allocation9], %s239
          %s241 = sshll.u32 [#allocation8], 4
          %s242 = int_to_ptr.vmem [resolvable:$true] %s241
          %247 = dma.hbm_to_vmem [thread:$0]  %s3, 512, %s242, [#allocation9], 128, 128, 8
        $region20: #{concat_dense_se.1} parent=11 // pred_fallthru
          _
        // Predicated region
        $region21: #{concat_dense_se.1} parent=11 // pred_check
          %p248 = pneg %p139
        $region22: #{concat_dense_se.1} parent=11 // pred_check_branch
          %250 = sbr.rel (%p248) target = $region24
        $region23: #{concat_dense_se.1} parent=11 // pred_region
          %s252 = ssub.s32 16, 16
          %253 = vsyncadd [#allocation9], %s252
          %s255 = sshll.u32 [#allocation10], 4
          %s256 = int_to_ptr.vmem [resolvable:$true] %s255
          %258 = dma.hbm_to_vmem [thread:$0]  %s4, 16, %s256, [#allocation9]
        $region24: #{concat_dense_se.1} parent=11 // pred_fallthru
          _
        // Predicated region
        $region25: #{concat_dense_se.1} parent=11 // pred_check
          %p259 = pneg %p160
        $region26: #{concat_dense_se.1} parent=11 // pred_check_branch
          %261 = sbr.rel (%p259) target = $region28
        $region27: #{concat_dense_se.1} parent=11 // pred_region
          %s263 = ssub.s32 512, 512
          %264 = vsyncadd [#allocation12], %s263
          %s265 = sshll.u32 [#allocation11], 4
          %s266 = int_to_ptr.vmem [resolvable:$true] %s265
          %271 = dma.hbm_to_vmem [thread:$0]  %s5, 512, %s266, [#allocation12], 128, 128, 8
        $region28: #{concat_dense_se.1} parent=11 // pred_fallthru
          _
        // Predicated region
        $region29: #{concat_dense_se.1} parent=11 // pred_check
          %p272 = pneg %p181
        $region30: #{concat_dense_se.1} parent=11 // pred_check_branch
          %274 = sbr.rel (%p272) target = $region32
        $region31: #{concat_dense_se.1} parent=11 // pred_region
          %s276 = ssub.s32 2048, 2048
          %277 = vsyncadd [#allocation12], %s276
          %s278 = sshll.u32 [#allocation13], 4
          %s279 = int_to_ptr.vmem [resolvable:$true] %s278
          %284 = dma.hbm_to_vmem [thread:$0]  %s6, 2048, %s279, [#allocation12], 128, 128, 8
        $region32: #{concat_dense_se.1} parent=11 // pred_fallthru
          _
      $region12: #{concat_dense_se.1} parent=5 // pred_fallthru
        _
      %p285 = scmp.lt.s32.totalorder %s24, 2
      // Predicated region
      $region33: #{concat_dense_se.1} parent=5 // pred_check
        %p286 = pneg %p285
      $region34: #{concat_dense_se.1} parent=5 // pred_check_branch
        %288 = sbr.rel (%p286) target = $region36
      $region35: #{concat_dense_se.1} parent=5 // pred_region
        // Predicated region
        $region37: #{concat_dense_se.1} parent=35 // pred_check
          %p289 = pneg %p44
        $region38: #{concat_dense_se.1} parent=35 // pred_check_branch
          %291 = sbr.rel (%p289) target = $region40
        $region39: #{concat_dense_se.1} parent=35 // pred_region
          %s292 = sand.u32 %s34, 1
          %s293 = scalar_lea.sflag [#allocation3], %s292
          %s294 = sand.u32 %s34, 1
          %s295 = smul.addr %s294, 128
          %s296 = scalar_lea.vmem [#allocation2], %s295
          %s297 = smul.u32 16, %s24
          %s299 = ssub.s32 2048, 2048
          %300 = vsyncadd %s293, %s299
          %s301 = smul.addr %s297, 128
          %s302 = scalar_lea.hbm %s0, %s301
          %s303 = sshll.u32 %s296, 4
          %s304 = int_to_ptr.vmem [resolvable:$true] %s303
          %309 = dma.hbm_to_vmem [thread:$0]  %s302, 2048, %s304, %s293, 128, 128, 8
        $region40: #{concat_dense_se.1} parent=35 // pred_fallthru
          _
        // Predicated region
        $region41: #{concat_dense_se.1} parent=35 // pred_check
          %p310 = pneg %p70
        $region42: #{concat_dense_se.1} parent=35 // pred_check_branch
          %312 = sbr.rel (%p310) target = $region44
        $region43: #{concat_dense_se.1} parent=35 // pred_region
          %s313 = sand.u32 %s24, 1
          %s314 = scalar_lea.sflag [#allocation6], %s313
          %s315 = sand.u32 %s60, 1
          %s316 = smul.addr %s315, 128
          %s317 = scalar_lea.vmem [#allocation5], %s316
          %s318 = smul.u32 16, %s24
          %s320 = ssub.s32 2048, 2048
          %321 = vsyncadd %s314, %s320
          %s322 = smul.addr %s318, 128
          %s323 = scalar_lea.hbm %s1, %s322
          %s324 = sshll.u32 %s317, 4
          %s325 = int_to_ptr.vmem [resolvable:$true] %s324
          %330 = dma.hbm_to_vmem [thread:$0]  %s323, 2048, %s325, %s314, 128, 128, 8
        $region44: #{concat_dense_se.1} parent=35 // pred_fallthru
          _
      $region36: #{concat_dense_se.1} parent=5 // pred_fallthru
        _
      %p331 = scmp.le.s32.totalorder 1, %s24
      %p332 = scmp.lt.s32.totalorder %s24, 3
      %p333 = pnand %p331, %p332
      %p334 = pneg %p333
      // Predicated region
      $region45: #{concat_dense_se.1} parent=5 // pred_check
        _
      $region46: #{concat_dense_se.1} parent=5 // pred_check_branch
        %336 = sbr.rel (%p333) target = $region48
      $region47: #{concat_dense_se.1} parent=5 // pred_region
        %s337 = ssub.s32 %s24, 1
        %s338 = sand.u32 %s37, 1
        %s339 = scalar_lea.sflag [#allocation3], %s338
        %s340 = sand.u32 %s37, 1
        %s341 = smul.addr %s340, 128
        %s342 = scalar_lea.vmem [#allocation2], %s341
        // Predicated region
        $region49: #{concat_dense_se.1} parent=47 // pred_check
          %p343 = pneg %p50
        $region50: #{concat_dense_se.1} parent=47 // pred_check_branch
          %345 = sbr.rel (%p343) target = $region52
        $region51: #{concat_dense_se.1} parent=47 // pred_region
          %346 = dma.done %s339, 2048
        $region52: #{concat_dense_se.1} parent=47 // pred_fallthru
          _
        %s347 = sand.u32 %s29, 1
        %s348 = scalar_lea.sflag [#allocation6], %s347
        %s349 = sand.u32 %s63, 1
        %s350 = smul.addr %s349, 128
        %s351 = scalar_lea.vmem [#allocation5], %s350
        // Predicated region
        $region53: #{concat_dense_se.1} parent=47 // pred_check
          %p352 = pneg %p76
        $region54: #{concat_dense_se.1} parent=47 // pred_check_branch
          %354 = sbr.rel (%p352) target = $region56
        $region55: #{concat_dense_se.1} parent=47 // pred_region
          %355 = dma.done %s348, 2048
        $region56: #{concat_dense_se.1} parent=47 // pred_fallthru
          _
        // Predicated region
        $region57: #{concat_dense_se.1} parent=47 // pred_check
          %p356 = pneg %p97
        $region58: #{concat_dense_se.1} parent=47 // pred_check_branch
          %358 = sbr.rel (%p356) target = $region60
        $region59: #{concat_dense_se.1} parent=47 // pred_region
          %359 = dma.done [#allocation6], 512
        $region60: #{concat_dense_se.1} parent=47 // pred_fallthru
          _
        // Predicated region
        $region61: #{concat_dense_se.1} parent=47 // pred_check
          %p360 = pneg %p118
        $region62: #{concat_dense_se.1} parent=47 // pred_check_branch
          %362 = sbr.rel (%p360) target = $region64
        $region63: #{concat_dense_se.1} parent=47 // pred_region
          %363 = dma.done [#allocation9], 512
        $region64: #{concat_dense_se.1} parent=47 // pred_fallthru
          _
        // Predicated region
        $region65: #{concat_dense_se.1} parent=47 // pred_check
          %p364 = pneg %p139
        $region66: #{concat_dense_se.1} parent=47 // pred_check_branch
          %366 = sbr.rel (%p364) target = $region68
        $region67: #{concat_dense_se.1} parent=47 // pred_region
          %367 = dma.done [#allocation9], 16
        $region68: #{concat_dense_se.1} parent=47 // pred_fallthru
          _
        // Predicated region
        $region69: #{concat_dense_se.1} parent=47 // pred_check
          %p368 = pneg %p160
        $region70: #{concat_dense_se.1} parent=47 // pred_check_branch
          %370 = sbr.rel (%p368) target = $region72
        $region71: #{concat_dense_se.1} parent=47 // pred_region
          %371 = dma.done [#allocation12], 512
        $region72: #{concat_dense_se.1} parent=47 // pred_fallthru
          _
        // Predicated region
        $region73: #{concat_dense_se.1} parent=47 // pred_check
          %p372 = pneg %p181
        $region74: #{concat_dense_se.1} parent=47 // pred_check_branch
          %374 = sbr.rel (%p372) target = $region76
        $region75: #{concat_dense_se.1} parent=47 // pred_region
          %375 = dma.done [#allocation12], 2048
        $region76: #{concat_dense_se.1} parent=47 // pred_fallthru
          _
        %s376 = sand.u32 %s37, 1
        %s377 = scalar_lea.sflag [#allocation3], %s376
        %s378 = sand.u32 %s37, 1
        %s379 = smul.addr %s378, 128
        %s380 = scalar_lea.vmem [#allocation2], %s379
        %p381 = pneg %p50
        %p382 = pneg %p47
        %s383 = sand.u32 %s29, 1
        %s384 = scalar_lea.sflag [#allocation6], %s383
        %s385 = sand.u32 %s63, 1
        %s386 = smul.addr %s385, 128
        %s387 = scalar_lea.vmem [#allocation5], %s386
        %p388 = pneg %p76
        %p389 = pneg %p73
        %p390 = pneg %p97
        %p391 = pneg %p94
        %p392 = pneg %p118
        %p393 = pneg %p115
        %p394 = pneg %p139
        %p395 = pneg %p136
        %p396 = pneg %p160
        %p397 = pneg %p157
        %p398 = pneg %p181
        %p399 = pneg %p178
        %p400 = pneg %p207
        %p401 = pneg %p204
        %s402 = sand.u32 %s194, 1
        %s403 = scalar_lea.sflag [#allocation4], %s402
        %s404 = sand.u32 %s194, 1
        %s405 = smul.addr %s404, 128
        %s406 = scalar_lea.vmem [#allocation14], %s405
        %s407 = smul.u32 16, %s29
        %s408 = smul.u32 16, %s29
        %s409 = smul.u32 16, %s29
        %v410 = vld [vmem:[%s342] sm:$0xff]
        %v411 = vld [vmem:[%s342 + $0x8] sm:$0xff]
        %v412 = vld [vmem:[%s342 + $0x10] sm:$0xff]
        %v413 = vld [vmem:[%s342 + $0x18] sm:$0xff]
        %v414 = vld [vmem:[%s342 + $0x20] sm:$0xff]
        %v415 = vld [vmem:[%s342 + $0x28] sm:$0xff]
        %v416 = vld [vmem:[%s342 + $0x30] sm:$0xff]
        %v417 = vld [vmem:[%s342 + $0x38] sm:$0xff]
        %v418 = vld [vmem:[%s342 + $0x40] sm:$0xff]
        %v419 = vld [vmem:[%s342 + $0x48] sm:$0xff]
        %v420 = vld [vmem:[%s342 + $0x50] sm:$0xff]
        %v421 = vld [vmem:[%s342 + $0x58] sm:$0xff]
        %v422 = vld [vmem:[%s342 + $0x60] sm:$0xff]
        %v423 = vld [vmem:[%s342 + $0x68] sm:$0xff]
        %v424 = vld [vmem:[%s342 + $0x70] sm:$0xff]
        %v425 = vld [vmem:[%s342 + $0x78] sm:$0xff]
        %v426 = vld [vmem:[#allocation7] sm:$0xff]
        %v427 = vld [vmem:[#allocation7 + $0x8] sm:$0xff]
        %v428 = vld [vmem:[#allocation7 + $0x10] sm:$0xff]
        %v429 = vld [vmem:[#allocation7 + $0x18] sm:$0xff]
        %v430 = vld [vmem:[%s351] sm:$0xff]
        %v431 = vld [vmem:[%s351 + $0x8] sm:$0xff]
        %v432 = vld [vmem:[%s351 + $0x10] sm:$0xff]
        %v433 = vld [vmem:[%s351 + $0x18] sm:$0xff]
        %v434 = vld [vmem:[%s351 + $0x20] sm:$0xff]
        %v435 = vld [vmem:[%s351 + $0x28] sm:$0xff]
        %v436 = vld [vmem:[%s351 + $0x30] sm:$0xff]
        %v437 = vld [vmem:[%s351 + $0x38] sm:$0xff]
        %v438 = vld [vmem:[%s351 + $0x40] sm:$0xff]
        %v439 = vld [vmem:[%s351 + $0x48] sm:$0xff]
        %v440 = vld [vmem:[%s351 + $0x50] sm:$0xff]
        %v441 = vld [vmem:[%s351 + $0x58] sm:$0xff]
        %v442 = vld [vmem:[%s351 + $0x60] sm:$0xff]
        %v443 = vld [vmem:[%s351 + $0x68] sm:$0xff]
        %v444 = vld [vmem:[%s351 + $0x70] sm:$0xff]
        %v445 = vld [vmem:[%s351 + $0x78] sm:$0xff]
        %v446 = vld [vmem:[#allocation8] sm:$0xff]
        %v447 = vld [vmem:[#allocation8 + $0x8] sm:$0xff]
        %v448 = vld [vmem:[#allocation8 + $0x10] sm:$0xff]
        %v449 = vld [vmem:[#allocation8 + $0x18] sm:$0xff]
        %vm450 = vcmask 261120
        %v452 = vsel %vm450, %v430, 0
        %v455 = vsel %vm450, %v431, 0
        %v458 = vsel %vm450, %v432, 0
        %v461 = vsel %vm450, %v433, 0
        %v464 = vsel %vm450, %v434, 0
        %v467 = vsel %vm450, %v435, 0
        %v470 = vsel %vm450, %v436, 0
        %v473 = vsel %vm450, %v437, 0
        %v476 = vsel %vm450, %v438, 0
        %v479 = vsel %vm450, %v439, 0
        %v482 = vsel %vm450, %v440, 0
        %v485 = vsel %vm450, %v441, 0
        %v488 = vsel %vm450, %v442, 0
        %v491 = vsel %vm450, %v443, 0
        %v494 = vsel %vm450, %v444, 0
        %v497 = vsel %vm450, %v445, 0
        %499 = vmatprep.subr.mxu0 0.0
        %500 = vmatpush1.msra.mxu0 %v446
        %501 = vmatprep.subr.mxu0 0.0
        %502 = vmatpush1.msra.mxu0 %v447
        %503 = vmatprep.subr.mxu0 0.0
        %504 = vmatpush1.msra.mxu0 %v448
        %505 = vmatprep.subr.mxu0 0.0
        %506 = vmatpush1.msra.mxu0 %v449
        %507 = vmatprep.subr.mxu0 0.0
        %508 = vmatpush1.msra.mxu0 0.0
        %509 = vmatprep.subr.mxu0 0.0
        %510 = vmatpush1.msra.mxu0 0.0
        %511 = vmatprep.subr.mxu0 0.0
        %512 = vmatpush1.msra.mxu0 0.0
        %513 = vmatprep.subr.mxu0 0.0
        %514 = vmatpush1.msra.mxu0 0.0
        %515 = vmatprep.subr.mxu0 0.0
        %516 = vmatpush1.msra.mxu0 0.0
        %517 = vmatprep.subr.mxu0 0.0
        %518 = vmatpush1.msra.mxu0 0.0
        %519 = vmatprep.subr.mxu0 0.0
        %520 = vmatpush1.msra.mxu0 0.0
        %521 = vmatprep.subr.mxu0 0.0
        %522 = vmatpush1.msra.mxu0 0.0
        %523 = vmatprep.subr.mxu0 0.0
        %524 = vmatpush1.msra.mxu0 0.0
        %525 = vmatprep.subr.mxu0 0.0
        %526 = vmatpush1.msra.mxu0 0.0
        %527 = vmatprep.subr.mxu0 0.0
        %528 = vmatpush1.msra.mxu0 0.0
        %529 = vmatprep.subr.mxu0 0.0
        %530 = vmatpush1.msra.mxu0 0.0
        %531 = vmatprep.subr.mxu0 0.0
        %532 = vmatpush1.msra.mxu0 0.0
        %533 = vmatprep.subr.mxu0 0.0
        %534 = vmatpush1.msra.mxu0 0.0
        %535 = vmatprep.subr.mxu0 0.0
        %536 = vmatpush1.msra.mxu0 0.0
        %537 = vmatprep.subr.mxu0 0.0
        %538 = vmatpush1.msra.mxu0 0.0
        %539 = vmatprep.subr.mxu0 0.0
        %540 = vmatpush1.msra.mxu0 0.0
        %541 = vmatprep.subr.mxu0 0.0
        %542 = vmatpush1.msra.mxu0 0.0
        %543 = vmatprep.subr.mxu0 0.0
        %544 = vmatpush1.msra.mxu0 0.0
        %545 = vmatprep.subr.mxu0 0.0
        %546 = vmatpush1.msra.mxu0 0.0
        %547 = vmatprep.subr.mxu0 0.0
        %548 = vmatpush1.msra.mxu0 0.0
        %549 = vmatprep.subr.mxu0 0.0
        %550 = vmatpush1.msra.mxu0 0.0
        %551 = vmatprep.subr.mxu0 0.0
        %552 = vmatpush1.msra.mxu0 0.0
        %553 = vmatprep.subr.mxu0 0.0
        %554 = vmatpush1.msra.mxu0 0.0
        %555 = vmatprep.subr.mxu0 0.0
        %556 = vmatpush1.msra.mxu0 0.0
        %557 = vmatprep.subr.mxu0 0.0
        %558 = vmatpush1.msra.mxu0 0.0
        %559 = vmatprep.subr.mxu0 0.0
        %560 = vmatpush1.msra.mxu0 0.0
        %561 = vmatprep.subr.mxu0 0.0
        %562 = vmatpush1.msra.mxu0 0.0
        %563 = vmatprep.mubr.f32.mxu0 0.0
        %564 = vmatmul.mubr.f32.gmra.mrb[0].mxu0 %v452
        %v565 = vpop.f32.mrb[0].mxu0
        %v566 = vadd.f32 0.0, %v565
        %v567 = vpop.f32.mrb[0].mxu0
        %568 = vmatprep.mubr.f32.mxu0 0.0
        %569 = vmatmul.mubr.f32.gmra.mrb[0].mxu0 %v455
        %v570 = vpop.f32.mrb[0].mxu0
        %v571 = vadd.f32 0.0, %v570
        %v572 = vpop.f32.mrb[0].mxu0
        %573 = vmatprep.mubr.f32.mxu0 0.0
        %574 = vmatmul.mubr.f32.gmra.mrb[0].mxu0 %v458
        %v575 = vpop.f32.mrb[0].mxu0
        %v576 = vadd.f32 0.0, %v575
        %v577 = vpop.f32.mrb[0].mxu0
        %578 = vmatprep.mubr.f32.mxu0 0.0
        %579 = vmatmul.mubr.f32.gmra.mrb[0].mxu0 %v461
        %v580 = vpop.f32.mrb[0].mxu0
        %v581 = vadd.f32 0.0, %v580
        %v582 = vpop.f32.mrb[0].mxu0
        %583 = vmatprep.mubr.f32.mxu0 0.0
        %584 = vmatmul.mubr.f32.gmra.mrb[0].mxu0 %v464
        %v585 = vpop.f32.mrb[0].mxu0
        %v586 = vadd.f32 0.0, %v585
        %v587 = vpop.f32.mrb[0].mxu0
        %588 = vmatprep.mubr.f32.mxu0 0.0
        %589 = vmatmul.mubr.f32.gmra.mrb[0].mxu0 %v467
        %v590 = vpop.f32.mrb[0].mxu0
        %v591 = vadd.f32 0.0, %v590
        %v592 = vpop.f32.mrb[0].mxu0
        %593 = vmatprep.mubr.f32.mxu0 0.0
        %594 = vmatmul.mubr.f32.gmra.mrb[0].mxu0 %v470
        %v595 = vpop.f32.mrb[0].mxu0
        %v596 = vadd.f32 0.0, %v595
        %v597 = vpop.f32.mrb[0].mxu0
        %598 = vmatprep.mubr.f32.mxu0 0.0
        %599 = vmatmul.mubr.f32.gmra.mrb[0].mxu0 %v473
        %v600 = vpop.f32.mrb[0].mxu0
        %v601 = vadd.f32 0.0, %v600
        %v602 = vpop.f32.mrb[0].mxu0
        %603 = vmatprep.mubr.f32.mxu0 0.0
        %604 = vmatmul.mubr.f32.gmra.mrb[0].mxu0 %v476
        %v605 = vpop.f32.mrb[0].mxu0
        %v606 = vadd.f32 0.0, %v605
        %v607 = vpop.f32.mrb[0].mxu0
        %608 = vmatprep.mubr.f32.mxu0 0.0
        %609 = vmatmul.mubr.f32.gmra.mrb[0].mxu0 %v479
        %v610 = vpop.f32.mrb[0].mxu0
        %v611 = vadd.f32 0.0, %v610
        %v612 = vpop.f32.mrb[0].mxu0
        %613 = vmatprep.mubr.f32.mxu0 0.0
        %614 = vmatmul.mubr.f32.gmra.mrb[0].mxu0 %v482
        %v615 = vpop.f32.mrb[0].mxu0
        %v616 = vadd.f32 0.0, %v615
        %v617 = vpop.f32.mrb[0].mxu0
        %618 = vmatprep.mubr.f32.mxu0 0.0
        %619 = vmatmul.mubr.f32.gmra.mrb[0].mxu0 %v485
        %v620 = vpop.f32.mrb[0].mxu0
        %v621 = vadd.f32 0.0, %v620
        %v622 = vpop.f32.mrb[0].mxu0
        %623 = vmatprep.mubr.f32.mxu0 0.0
        %624 = vmatmul.mubr.f32.gmra.mrb[0].mxu0 %v488
        %v625 = vpop.f32.mrb[0].mxu0
        %v626 = vadd.f32 0.0, %v625
        %v627 = vpop.f32.mrb[0].mxu0
        %628 = vmatprep.mubr.f32.mxu0 0.0
        %629 = vmatmul.mubr.f32.gmra.mrb[0].mxu0 %v491
        %v630 = vpop.f32.mrb[0].mxu0
        %v631 = vadd.f32 0.0, %v630
        %v632 = vpop.f32.mrb[0].mxu0
        %633 = vmatprep.mubr.f32.mxu0 0.0
        %634 = vmatmul.mubr.f32.gmra.mrb[0].mxu0 %v494
        %v635 = vpop.f32.mrb[0].mxu0
        %v636 = vadd.f32 0.0, %v635
        %v637 = vpop.f32.mrb[0].mxu0
        %638 = vmatprep.mubr.f32.mxu0 0.0
        %639 = vmatmul.mubr.f32.gmra.mrb[0].mxu0 %v497
        %v640 = vpop.f32.mrb[0].mxu0
        %v641 = vadd.f32 0.0, %v640
        %v642 = vpop.f32.mrb[0].mxu0
        %643 = vdwg.mxu0
        %v645 = vsel %vm450, %v410, 0
        %v648 = vsel %vm450, %v411, 0
        %v651 = vsel %vm450, %v412, 0
        %v654 = vsel %vm450, %v413, 0
        %v657 = vsel %vm450, %v414, 0
        %v660 = vsel %vm450, %v415, 0
        %v663 = vsel %vm450, %v416, 0
        %v666 = vsel %vm450, %v417, 0
        %v669 = vsel %vm450, %v418, 0
        %v672 = vsel %vm450, %v419, 0
        %v675 = vsel %vm450, %v420, 0
        %v678 = vsel %vm450, %v421, 0
        %v681 = vsel %vm450, %v422, 0
        %v684 = vsel %vm450, %v423, 0
        %v687 = vsel %vm450, %v424, 0
        %v690 = vsel %vm450, %v425, 0
        %692 = vmatprep.subr.mxu0 0.0
        %693 = vmatpush1.msra.mxu0 %v426
        %694 = vmatprep.subr.mxu0 0.0
        %695 = vmatpush1.msra.mxu0 %v427
        %696 = vmatprep.subr.mxu0 0.0
        %697 = vmatpush1.msra.mxu0 %v428
        %698 = vmatprep.subr.mxu0 0.0
        %699 = vmatpush1.msra.mxu0 %v429
        %700 = vmatprep.subr.mxu0 0.0
        %701 = vmatpush1.msra.mxu0 0.0
        %702 = vmatprep.subr.mxu0 0.0
        %703 = vmatpush1.msra.mxu0 0.0
        %704 = vmatprep.subr.mxu0 0.0
        %705 = vmatpush1.msra.mxu0 0.0
        %706 = vmatprep.subr.mxu0 0.0
        %707 = vmatpush1.msra.mxu0 0.0
        %708 = vmatprep.subr.mxu0 0.0
        %709 = vmatpush1.msra.mxu0 0.0
        %710 = vmatprep.subr.mxu0 0.0
        %711 = vmatpush1.msra.mxu0 0.0
        %712 = vmatprep.subr.mxu0 0.0
        %713 = vmatpush1.msra.mxu0 0.0
        %714 = vmatprep.subr.mxu0 0.0
        %715 = vmatpush1.msra.mxu0 0.0
        %716 = vmatprep.subr.mxu0 0.0
        %717 = vmatpush1.msra.mxu0 0.0
        %718 = vmatprep.subr.mxu0 0.0
        %719 = vmatpush1.msra.mxu0 0.0
        %720 = vmatprep.subr.mxu0 0.0
        %721 = vmatpush1.msra.mxu0 0.0
        %722 = vmatprep.subr.mxu0 0.0
        %723 = vmatpush1.msra.mxu0 0.0
        %724 = vmatprep.subr.mxu0 0.0
        %725 = vmatpush1.msra.mxu0 0.0
        %726 = vmatprep.subr.mxu0 0.0
        %727 = vmatpush1.msra.mxu0 0.0
        %728 = vmatprep.subr.mxu0 0.0
        %729 = vmatpush1.msra.mxu0 0.0
        %730 = vmatprep.subr.mxu0 0.0
        %731 = vmatpush1.msra.mxu0 0.0
        %732 = vmatprep.subr.mxu0 0.0
        %733 = vmatpush1.msra.mxu0 0.0
        %734 = vmatprep.subr.mxu0 0.0
        %735 = vmatpush1.msra.mxu0 0.0
        %736 = vmatprep.subr.mxu0 0.0
        %737 = vmatpush1.msra.mxu0 0.0
        %738 = vmatprep.subr.mxu0 0.0
        %739 = vmatpush1.msra.mxu0 0.0
        %740 = vmatprep.subr.mxu0 0.0
        %741 = vmatpush1.msra.mxu0 0.0
        %742 = vmatprep.subr.mxu0 0.0
        %743 = vmatpush1.msra.mxu0 0.0
        %744 = vmatprep.subr.mxu0 0.0
        %745 = vmatpush1.msra.mxu0 0.0
        %746 = vmatprep.subr.mxu0 0.0
        %747 = vmatpush1.msra.mxu0 0.0
        %748 = vmatprep.subr.mxu0 0.0
        %749 = vmatpush1.msra.mxu0 0.0
        %750 = vmatprep.subr.mxu0 0.0
        %751 = vmatpush1.msra.mxu0 0.0
        %752 = vmatprep.subr.mxu0 0.0
        %753 = vmatpush1.msra.mxu0 0.0
        %754 = vmatprep.subr.mxu0 0.0
        %755 = vmatpush1.msra.mxu0 0.0
        %756 = vmatprep.mubr.f32.mxu0 0.0
        %757 = vmatmul.mubr.f32.gmra.mrb[0].mxu0 %v645
        %v758 = vpop.f32.mrb[0].mxu0
        %v759 = vadd.f32 %v566, %v758
        %v760 = vpop.f32.mrb[0].mxu0
        %761 = vmatprep.mubr.f32.mxu0 0.0
        %762 = vmatmul.mubr.f32.gmra.mrb[0].mxu0 %v648
        %v763 = vpop.f32.mrb[0].mxu0
        %v764 = vadd.f32 %v571, %v763
        %v765 = vpop.f32.mrb[0].mxu0
        %766 = vmatprep.mubr.f32.mxu0 0.0
        %767 = vmatmul.mubr.f32.gmra.mrb[0].mxu0 %v651
        %v768 = vpop.f32.mrb[0].mxu0
        %v769 = vadd.f32 %v576, %v768
        %v770 = vpop.f32.mrb[0].mxu0
        %771 = vmatprep.mubr.f32.mxu0 0.0
        %772 = vmatmul.mubr.f32.gmra.mrb[0].mxu0 %v654
        %v773 = vpop.f32.mrb[0].mxu0
        %v774 = vadd.f32 %v581, %v773
        %v775 = vpop.f32.mrb[0].mxu0
        %776 = vmatprep.mubr.f32.mxu0 0.0
        %777 = vmatmul.mubr.f32.gmra.mrb[0].mxu0 %v657
        %v778 = vpop.f32.mrb[0].mxu0
        %v779 = vadd.f32 %v586, %v778
        %v780 = vpop.f32.mrb[0].mxu0
        %781 = vmatprep.mubr.f32.mxu0 0.0
        %782 = vmatmul.mubr.f32.gmra.mrb[0].mxu0 %v660
        %v783 = vpop.f32.mrb[0].mxu0
        %v784 = vadd.f32 %v591, %v783
        %v785 = vpop.f32.mrb[0].mxu0
        %786 = vmatprep.mubr.f32.mxu0 0.0
        %787 = vmatmul.mubr.f32.gmra.mrb[0].mxu0 %v663
        %v788 = vpop.f32.mrb[0].mxu0
        %v789 = vadd.f32 %v596, %v788
        %v790 = vpop.f32.mrb[0].mxu0
        %791 = vmatprep.mubr.f32.mxu0 0.0
        %792 = vmatmul.mubr.f32.gmra.mrb[0].mxu0 %v666
        %v793 = vpop.f32.mrb[0].mxu0
        %v794 = vadd.f32 %v601, %v793
        %v795 = vpop.f32.mrb[0].mxu0
        %796 = vmatprep.mubr.f32.mxu0 0.0
        %797 = vmatmul.mubr.f32.gmra.mrb[0].mxu0 %v669
        %v798 = vpop.f32.mrb[0].mxu0
        %v799 = vadd.f32 %v606, %v798
        %v800 = vpop.f32.mrb[0].mxu0
        %801 = vmatprep.mubr.f32.mxu0 0.0
        %802 = vmatmul.mubr.f32.gmra.mrb[0].mxu0 %v672
        %v803 = vpop.f32.mrb[0].mxu0
        %v804 = vadd.f32 %v611, %v803
        %v805 = vpop.f32.mrb[0].mxu0
        %806 = vmatprep.mubr.f32.mxu0 0.0
        %807 = vmatmul.mubr.f32.gmra.mrb[0].mxu0 %v675
        %v808 = vpop.f32.mrb[0].mxu0
        %v809 = vadd.f32 %v616, %v808
        %v810 = vpop.f32.mrb[0].mxu0
        %811 = vmatprep.mubr.f32.mxu0 0.0
        %812 = vmatmul.mubr.f32.gmra.mrb[0].mxu0 %v678
        %v813 = vpop.f32.mrb[0].mxu0
        %v814 = vadd.f32 %v621, %v813
        %v815 = vpop.f32.mrb[0].mxu0
        %816 = vmatprep.mubr.f32.mxu0 0.0
        %817 = vmatmul.mubr.f32.gmra.mrb[0].mxu0 %v681
        %v818 = vpop.f32.mrb[0].mxu0
        %v819 = vadd.f32 %v626, %v818
        %v820 = vpop.f32.mrb[0].mxu0
        %821 = vmatprep.mubr.f32.mxu0 0.0
        %822 = vmatmul.mubr.f32.gmra.mrb[0].mxu0 %v684
        %v823 = vpop.f32.mrb[0].mxu0
        %v824 = vadd.f32 %v631, %v823
        %v825 = vpop.f32.mrb[0].mxu0
        %826 = vmatprep.mubr.f32.mxu0 0.0
        %827 = vmatmul.mubr.f32.gmra.mrb[0].mxu0 %v687
        %v828 = vpop.f32.mrb[0].mxu0
        %v829 = vadd.f32 %v636, %v828
        %v830 = vpop.f32.mrb[0].mxu0
        %831 = vmatprep.mubr.f32.mxu0 0.0
        %832 = vmatmul.mubr.f32.gmra.mrb[0].mxu0 %v690
        %v833 = vpop.f32.mrb[0].mxu0
        %v834 = vadd.f32 %v641, %v833
        %v835 = vpop.f32.mrb[0].mxu0
        %836 = vdwg.mxu0
        %v837 = vld [vmem:[#allocation10] sm:$0x1]
        %v839 = vlaneseq
        %v840 = vshrl.u32 %v839, 7
        %v841 = vsub.s32 0, %v840
        %v842 = vrot.slane %v837, %v841
        %v844 = vadd.f32 %v759, %v842
        %v845 = vadd.f32 %v764, %v842
        %v846 = vadd.f32 %v769, %v842
        %v847 = vadd.f32 %v774, %v842
        %v848 = vadd.f32 %v779, %v842
        %v849 = vadd.f32 %v784, %v842
        %v850 = vadd.f32 %v789, %v842
        %v851 = vadd.f32 %v794, %v842
        %v852 = vadd.f32 %v799, %v842
        %v853 = vadd.f32 %v804, %v842
        %v854 = vadd.f32 %v809, %v842
        %v855 = vadd.f32 %v814, %v842
        %v856 = vadd.f32 %v819, %v842
        %v857 = vadd.f32 %v824, %v842
        %v858 = vadd.f32 %v829, %v842
        %v859 = vadd.f32 %v834, %v842
        %v860 = vld [vmem:[#allocation11] sm:$0xff]
        %v861 = vld [vmem:[#allocation11 + $0x8] sm:$0xff]
        %v862 = vld [vmem:[#allocation11 + $0x10] sm:$0xff]
        %v863 = vld [vmem:[#allocation11 + $0x18] sm:$0xff]
        %v865 = vsel %vm450, %v844, 0
        %v868 = vsel %vm450, %v845, 0
        %v871 = vsel %vm450, %v846, 0
        %v874 = vsel %vm450, %v847, 0
        %v877 = vsel %vm450, %v848, 0
        %v880 = vsel %vm450, %v849, 0
        %v883 = vsel %vm450, %v850, 0
        %v886 = vsel %vm450, %v851, 0
        %v889 = vsel %vm450, %v852, 0
        %v892 = vsel %vm450, %v853, 0
        %v895 = vsel %vm450, %v854, 0
        %v898 = vsel %vm450, %v855, 0
        %v901 = vsel %vm450, %v856, 0
        %v904 = vsel %vm450, %v857, 0
        %v907 = vsel %vm450, %v858, 0
        %v910 = vsel %vm450, %v859, 0
        %912 = vmatprep.subr.mxu0 0.0
        %913 = vmatpush1.msra.mxu0 %v860
        %914 = vmatprep.subr.mxu0 0.0
        %915 = vmatpush1.msra.mxu0 %v861
        %916 = vmatprep.subr.mxu0 0.0
        %917 = vmatpush1.msra.mxu0 %v862
        %918 = vmatprep.subr.mxu0 0.0
        %919 = vmatpush1.msra.mxu0 %v863
        %920 = vmatprep.subr.mxu0 0.0
        %921 = vmatpush1.msra.mxu0 0.0
        %922 = vmatprep.subr.mxu0 0.0
        %923 = vmatpush1.msra.mxu0 0.0
        %924 = vmatprep.subr.mxu0 0.0
        %925 = vmatpush1.msra.mxu0 0.0
        %926 = vmatprep.subr.mxu0 0.0
        %927 = vmatpush1.msra.mxu0 0.0
        %928 = vmatprep.subr.mxu0 0.0
        %929 = vmatpush1.msra.mxu0 0.0
        %930 = vmatprep.subr.mxu0 0.0
        %931 = vmatpush1.msra.mxu0 0.0
        %932 = vmatprep.subr.mxu0 0.0
        %933 = vmatpush1.msra.mxu0 0.0
        %934 = vmatprep.subr.mxu0 0.0
        %935 = vmatpush1.msra.mxu0 0.0
        %936 = vmatprep.subr.mxu0 0.0
        %937 = vmatpush1.msra.mxu0 0.0
        %938 = vmatprep.subr.mxu0 0.0
        %939 = vmatpush1.msra.mxu0 0.0
        %940 = vmatprep.subr.mxu0 0.0
        %941 = vmatpush1.msra.mxu0 0.0
        %942 = vmatprep.subr.mxu0 0.0
        %943 = vmatpush1.msra.mxu0 0.0
        %944 = vmatprep.subr.mxu0 0.0
        %945 = vmatpush1.msra.mxu0 0.0
        %946 = vmatprep.subr.mxu0 0.0
        %947 = vmatpush1.msra.mxu0 0.0
        %948 = vmatprep.subr.mxu0 0.0
        %949 = vmatpush1.msra.mxu0 0.0
        %950 = vmatprep.subr.mxu0 0.0
        %951 = vmatpush1.msra.mxu0 0.0
        %952 = vmatprep.subr.mxu0 0.0
        %953 = vmatpush1.msra.mxu0 0.0
        %954 = vmatprep.subr.mxu0 0.0
        %955 = vmatpush1.msra.mxu0 0.0
        %956 = vmatprep.subr.mxu0 0.0
        %957 = vmatpush1.msra.mxu0 0.0
        %958 = vmatprep.subr.mxu0 0.0
        %959 = vmatpush1.msra.mxu0 0.0
        %960 = vmatprep.subr.mxu0 0.0
        %961 = vmatpush1.msra.mxu0 0.0
        %962 = vmatprep.subr.mxu0 0.0
        %963 = vmatpush1.msra.mxu0 0.0
        %964 = vmatprep.subr.mxu0 0.0
        %965 = vmatpush1.msra.mxu0 0.0
        %966 = vmatprep.subr.mxu0 0.0
        %967 = vmatpush1.msra.mxu0 0.0
        %968 = vmatprep.subr.mxu0 0.0
        %969 = vmatpush1.msra.mxu0 0.0
        %970 = vmatprep.subr.mxu0 0.0
        %971 = vmatpush1.msra.mxu0 0.0
        %972 = vmatprep.subr.mxu0 0.0
        %973 = vmatpush1.msra.mxu0 0.0
        %974 = vmatprep.subr.mxu0 0.0
        %975 = vmatpush1.msra.mxu0 0.0
        %976 = vmatprep.mubr.f32.mxu0 0.0
        %977 = vmatmul.mubr.f32.gmra.mrb[0].mxu0 %v865
        %v978 = vpop.f32.mrb[0].mxu0
        %v979 = vadd.f32 0.0, %v978
        %v980 = vpop.f32.mrb[0].mxu0
        %981 = vmatprep.mubr.f32.mxu0 0.0
        %982 = vmatmul.mubr.f32.gmra.mrb[0].mxu0 %v868
        %v983 = vpop.f32.mrb[0].mxu0
        %v984 = vadd.f32 0.0, %v983
        %v985 = vpop.f32.mrb[0].mxu0
        %986 = vmatprep.mubr.f32.mxu0 0.0
        %987 = vmatmul.mubr.f32.gmra.mrb[0].mxu0 %v871
        %v988 = vpop.f32.mrb[0].mxu0
        %v989 = vadd.f32 0.0, %v988
        %v990 = vpop.f32.mrb[0].mxu0
        %991 = vmatprep.mubr.f32.mxu0 0.0
        %992 = vmatmul.mubr.f32.gmra.mrb[0].mxu0 %v874
        %v993 = vpop.f32.mrb[0].mxu0
        %v994 = vadd.f32 0.0, %v993
        %v995 = vpop.f32.mrb[0].mxu0
        %996 = vmatprep.mubr.f32.mxu0 0.0
        %997 = vmatmul.mubr.f32.gmra.mrb[0].mxu0 %v877
        %v998 = vpop.f32.mrb[0].mxu0
        %v999 = vadd.f32 0.0, %v998
        %v1000 = vpop.f32.mrb[0].mxu0
        %1001 = vmatprep.mubr.f32.mxu0 0.0
        %1002 = vmatmul.mubr.f32.gmra.mrb[0].mxu0 %v880
        %v1003 = vpop.f32.mrb[0].mxu0
        %v1004 = vadd.f32 0.0, %v1003
        %v1005 = vpop.f32.mrb[0].mxu0
        %1006 = vmatprep.mubr.f32.mxu0 0.0
        %1007 = vmatmul.mubr.f32.gmra.mrb[0].mxu0 %v883
        %v1008 = vpop.f32.mrb[0].mxu0
        %v1009 = vadd.f32 0.0, %v1008
        %v1010 = vpop.f32.mrb[0].mxu0
        %1011 = vmatprep.mubr.f32.mxu0 0.0
        %1012 = vmatmul.mubr.f32.gmra.mrb[0].mxu0 %v886
        %v1013 = vpop.f32.mrb[0].mxu0
        %v1014 = vadd.f32 0.0, %v1013
        %v1015 = vpop.f32.mrb[0].mxu0
        %1016 = vmatprep.mubr.f32.mxu0 0.0
        %1017 = vmatmul.mubr.f32.gmra.mrb[0].mxu0 %v889
        %v1018 = vpop.f32.mrb[0].mxu0
        %v1019 = vadd.f32 0.0, %v1018
        %v1020 = vpop.f32.mrb[0].mxu0
        %1021 = vmatprep.mubr.f32.mxu0 0.0
        %1022 = vmatmul.mubr.f32.gmra.mrb[0].mxu0 %v892
        %v1023 = vpop.f32.mrb[0].mxu0
        %v1024 = vadd.f32 0.0, %v1023
        %v1025 = vpop.f32.mrb[0].mxu0
        %1026 = vmatprep.mubr.f32.mxu0 0.0
        %1027 = vmatmul.mubr.f32.gmra.mrb[0].mxu0 %v895
        %v1028 = vpop.f32.mrb[0].mxu0
        %v1029 = vadd.f32 0.0, %v1028
        %v1030 = vpop.f32.mrb[0].mxu0
        %1031 = vmatprep.mubr.f32.mxu0 0.0
        %1032 = vmatmul.mubr.f32.gmra.mrb[0].mxu0 %v898
        %v1033 = vpop.f32.mrb[0].mxu0
        %v1034 = vadd.f32 0.0, %v1033
        %v1035 = vpop.f32.mrb[0].mxu0
        %1036 = vmatprep.mubr.f32.mxu0 0.0
        %1037 = vmatmul.mubr.f32.gmra.mrb[0].mxu0 %v901
        %v1038 = vpop.f32.mrb[0].mxu0
        %v1039 = vadd.f32 0.0, %v1038
        %v1040 = vpop.f32.mrb[0].mxu0
        %1041 = vmatprep.mubr.f32.mxu0 0.0
        %1042 = vmatmul.mubr.f32.gmra.mrb[0].mxu0 %v904
        %v1043 = vpop.f32.mrb[0].mxu0
        %v1044 = vadd.f32 0.0, %v1043
        %v1045 = vpop.f32.mrb[0].mxu0
        %1046 = vmatprep.mubr.f32.mxu0 0.0
        %1047 = vmatmul.mubr.f32.gmra.mrb[0].mxu0 %v907
        %v1048 = vpop.f32.mrb[0].mxu0
        %v1049 = vadd.f32 0.0, %v1048
        %v1050 = vpop.f32.mrb[0].mxu0
        %1051 = vmatprep.mubr.f32.mxu0 0.0
        %1052 = vmatmul.mubr.f32.gmra.mrb[0].mxu0 %v910
        %v1053 = vpop.f32.mrb[0].mxu0
        %v1054 = vadd.f32 0.0, %v1053
        %v1055 = vpop.f32.mrb[0].mxu0
        %1056 = vdwg.mxu0
        %v1057 = vmax.f32 %v979, 0.0
        %v1058 = vmax.f32 %v984, 0.0
        %v1059 = vmax.f32 %v989, 0.0
        %v1060 = vmax.f32 %v994, 0.0
        %v1061 = vmax.f32 %v999, 0.0
        %v1062 = vmax.f32 %v1004, 0.0
        %v1063 = vmax.f32 %v1009, 0.0
        %v1064 = vmax.f32 %v1014, 0.0
        %v1065 = vmax.f32 %v1019, 0.0
        %v1066 = vmax.f32 %v1024, 0.0
        %v1067 = vmax.f32 %v1029, 0.0
        %v1068 = vmax.f32 %v1034, 0.0
        %v1069 = vmax.f32 %v1039, 0.0
        %v1070 = vmax.f32 %v1044, 0.0
        %v1071 = vmax.f32 %v1049, 0.0
        %v1072 = vmax.f32 %v1054, 0.0
        %v1073 = vld [vmem:[#allocation13] sm:$0xff]
        %v1074 = vld [vmem:[#allocation13 + $0x8] sm:$0xff]
        %v1075 = vld [vmem:[#allocation13 + $0x10] sm:$0xff]
        %v1076 = vld [vmem:[#allocation13 + $0x18] sm:$0xff]
        %v1077 = vld [vmem:[#allocation13 + $0x20] sm:$0xff]
        %v1078 = vld [vmem:[#allocation13 + $0x28] sm:$0xff]
        %v1079 = vld [vmem:[#allocation13 + $0x30] sm:$0xff]
        %v1080 = vld [vmem:[#allocation13 + $0x38] sm:$0xff]
        %v1081 = vld [vmem:[#allocation13 + $0x40] sm:$0xff]
        %v1082 = vld [vmem:[#allocation13 + $0x48] sm:$0xff]
        %v1083 = vld [vmem:[#allocation13 + $0x50] sm:$0xff]
        %v1084 = vld [vmem:[#allocation13 + $0x58] sm:$0xff]
        %v1085 = vld [vmem:[#allocation13 + $0x60] sm:$0xff]
        %v1086 = vld [vmem:[#allocation13 + $0x68] sm:$0xff]
        %v1087 = vld [vmem:[#allocation13 + $0x70] sm:$0xff]
        %v1088 = vld [vmem:[#allocation13 + $0x78] sm:$0xff]
        %1089 = vmatprep.subr.mxu0 0.0
        %1090 = vmatpush1.msra.mxu0 %v1073
        %1091 = vmatprep.subr.mxu0 0.0
        %1092 = vmatpush1.msra.mxu0 %v1074
        %1093 = vmatprep.subr.mxu0 0.0
        %1094 = vmatpush1.msra.mxu0 %v1075
        %1095 = vmatprep.subr.mxu0 0.0
        %1096 = vmatpush1.msra.mxu0 %v1076
        %1097 = vmatprep.subr.mxu0 0.0
        %1098 = vmatpush1.msra.mxu0 %v1077
        %1099 = vmatprep.subr.mxu0 0.0
        %1100 = vmatpush1.msra.mxu0 %v1078
        %1101 = vmatprep.subr.mxu0 0.0
        %1102 = vmatpush1.msra.mxu0 %v1079
        %1103 = vmatprep.subr.mxu0 0.0
        %1104 = vmatpush1.msra.mxu0 %v1080
        %1105 = vmatprep.subr.mxu0 0.0
        %1106 = vmatpush1.msra.mxu0 %v1081
        %1107 = vmatprep.subr.mxu0 0.0
        %1108 = vmatpush1.msra.mxu0 %v1082
        %1109 = vmatprep.subr.mxu0 0.0
        %1110 = vmatpush1.msra.mxu0 %v1083
        %1111 = vmatprep.subr.mxu0 0.0
        %1112 = vmatpush1.msra.mxu0 %v1084
        %1113 = vmatprep.subr.mxu0 0.0
        %1114 = vmatpush1.msra.mxu0 %v1085
        %1115 = vmatprep.subr.mxu0 0.0
        %1116 = vmatpush1.msra.mxu0 %v1086
        %1117 = vmatprep.subr.mxu0 0.0
        %1118 = vmatpush1.msra.mxu0 %v1087
        %1119 = vmatprep.subr.mxu0 0.0
        %1120 = vmatpush1.msra.mxu0 %v1088
        %1121 = vmatprep.subr.mxu0 0.0
        %1122 = vmatpush1.msra.mxu0 0.0
        %1123 = vmatprep.subr.mxu0 0.0
        %1124 = vmatpush1.msra.mxu0 0.0
        %1125 = vmatprep.subr.mxu0 0.0
        %1126 = vmatpush1.msra.mxu0 0.0
        %1127 = vmatprep.subr.mxu0 0.0
        %1128 = vmatpush1.msra.mxu0 0.0
        %1129 = vmatprep.subr.mxu0 0.0
        %1130 = vmatpush1.msra.mxu0 0.0
        %1131 = vmatprep.subr.mxu0 0.0
        %1132 = vmatpush1.msra.mxu0 0.0
        %1133 = vmatprep.subr.mxu0 0.0
        %1134 = vmatpush1.msra.mxu0 0.0
        %1135 = vmatprep.subr.mxu0 0.0
        %1136 = vmatpush1.msra.mxu0 0.0
        %1137 = vmatprep.subr.mxu0 0.0
        %1138 = vmatpush1.msra.mxu0 0.0
        %1139 = vmatprep.subr.mxu0 0.0
        %1140 = vmatpush1.msra.mxu0 0.0
        %1141 = vmatprep.subr.mxu0 0.0
        %1142 = vmatpush1.msra.mxu0 0.0
        %1143 = vmatprep.subr.mxu0 0.0
        %1144 = vmatpush1.msra.mxu0 0.0
        %1145 = vmatprep.subr.mxu0 0.0
        %1146 = vmatpush1.msra.mxu0 0.0
        %1147 = vmatprep.subr.mxu0 0.0
        %1148 = vmatpush1.msra.mxu0 0.0
        %1149 = vmatprep.subr.mxu0 0.0
        %1150 = vmatpush1.msra.mxu0 0.0
        %1151 = vmatprep.subr.mxu0 0.0
        %1152 = vmatpush1.msra.mxu0 0.0
        %1153 = vmatprep.mubr.f32.mxu0 0.0
        %1154 = vmatmul.mubr.f32.gmra.mrb[0].mxu0 %v1057
        %v1155 = vpop.f32.mrb[0].mxu0
        %v1156 = vadd.f32 0.0, %v1155
        %v1157 = vpop.f32.mrb[0].mxu0
        %1158 = vmatprep.mubr.f32.mxu0 0.0
        %1159 = vmatmul.mubr.f32.gmra.mrb[0].mxu0 %v1058
        %v1160 = vpop.f32.mrb[0].mxu0
        %v1161 = vadd.f32 0.0, %v1160
        %v1162 = vpop.f32.mrb[0].mxu0
        %1163 = vmatprep.mubr.f32.mxu0 0.0
        %1164 = vmatmul.mubr.f32.gmra.mrb[0].mxu0 %v1059
        %v1165 = vpop.f32.mrb[0].mxu0
        %v1166 = vadd.f32 0.0, %v1165
        %v1167 = vpop.f32.mrb[0].mxu0
        %1168 = vmatprep.mubr.f32.mxu0 0.0
        %1169 = vmatmul.mubr.f32.gmra.mrb[0].mxu0 %v1060
        %v1170 = vpop.f32.mrb[0].mxu0
        %v1171 = vadd.f32 0.0, %v1170
        %v1172 = vpop.f32.mrb[0].mxu0
        %1173 = vmatprep.mubr.f32.mxu0 0.0
        %1174 = vmatmul.mubr.f32.gmra.mrb[0].mxu0 %v1061
        %v1175 = vpop.f32.mrb[0].mxu0
        %v1176 = vadd.f32 0.0, %v1175
        %v1177 = vpop.f32.mrb[0].mxu0
        %1178 = vmatprep.mubr.f32.mxu0 0.0
        %1179 = vmatmul.mubr.f32.gmra.mrb[0].mxu0 %v1062
        %v1180 = vpop.f32.mrb[0].mxu0
        %v1181 = vadd.f32 0.0, %v1180
        %v1182 = vpop.f32.mrb[0].mxu0
        %1183 = vmatprep.mubr.f32.mxu0 0.0
        %1184 = vmatmul.mubr.f32.gmra.mrb[0].mxu0 %v1063
        %v1185 = vpop.f32.mrb[0].mxu0
        %v1186 = vadd.f32 0.0, %v1185
        %v1187 = vpop.f32.mrb[0].mxu0
        %1188 = vmatprep.mubr.f32.mxu0 0.0
        %1189 = vmatmul.mubr.f32.gmra.mrb[0].mxu0 %v1064
        %v1190 = vpop.f32.mrb[0].mxu0
        %v1191 = vadd.f32 0.0, %v1190
        %v1192 = vpop.f32.mrb[0].mxu0
        %1193 = vmatprep.mubr.f32.mxu0 0.0
        %1194 = vmatmul.mubr.f32.gmra.mrb[0].mxu0 %v1065
        %v1195 = vpop.f32.mrb[0].mxu0
        %v1196 = vadd.f32 0.0, %v1195
        %v1197 = vpop.f32.mrb[0].mxu0
        %1198 = vmatprep.mubr.f32.mxu0 0.0
        %1199 = vmatmul.mubr.f32.gmra.mrb[0].mxu0 %v1066
        %v1200 = vpop.f32.mrb[0].mxu0
        %v1201 = vadd.f32 0.0, %v1200
        %v1202 = vpop.f32.mrb[0].mxu0
        %1203 = vmatprep.mubr.f32.mxu0 0.0
        %1204 = vmatmul.mubr.f32.gmra.mrb[0].mxu0 %v1067
        %v1205 = vpop.f32.mrb[0].mxu0
        %v1206 = vadd.f32 0.0, %v1205
        %v1207 = vpop.f32.mrb[0].mxu0
        %1208 = vmatprep.mubr.f32.mxu0 0.0
        %1209 = vmatmul.mubr.f32.gmra.mrb[0].mxu0 %v1068
        %v1210 = vpop.f32.mrb[0].mxu0
        %v1211 = vadd.f32 0.0, %v1210
        %v1212 = vpop.f32.mrb[0].mxu0
        %1213 = vmatprep.mubr.f32.mxu0 0.0
        %1214 = vmatmul.mubr.f32.gmra.mrb[0].mxu0 %v1069
        %v1215 = vpop.f32.mrb[0].mxu0
        %v1216 = vadd.f32 0.0, %v1215
        %v1217 = vpop.f32.mrb[0].mxu0
        %1218 = vmatprep.mubr.f32.mxu0 0.0
        %1219 = vmatmul.mubr.f32.gmra.mrb[0].mxu0 %v1070
        %v1220 = vpop.f32.mrb[0].mxu0
        %v1221 = vadd.f32 0.0, %v1220
        %v1222 = vpop.f32.mrb[0].mxu0
        %1223 = vmatprep.mubr.f32.mxu0 0.0
        %1224 = vmatmul.mubr.f32.gmra.mrb[0].mxu0 %v1071
        %v1225 = vpop.f32.mrb[0].mxu0
        %v1226 = vadd.f32 0.0, %v1225
        %v1227 = vpop.f32.mrb[0].mxu0
        %1228 = vmatprep.mubr.f32.mxu0 0.0
        %1229 = vmatmul.mubr.f32.gmra.mrb[0].mxu0 %v1072
        %v1230 = vpop.f32.mrb[0].mxu0
        %v1231 = vadd.f32 0.0, %v1230
        %v1232 = vpop.f32.mrb[0].mxu0
        %1233 = vdwg.mxu0
        %v1234 = vxor.u32 %v1156, 2147483648
        %v1235 = vxor.u32 %v1161, 2147483648
        %v1236 = vxor.u32 %v1166, 2147483648
        %v1237 = vxor.u32 %v1171, 2147483648
        %v1238 = vxor.u32 %v1176, 2147483648
        %v1239 = vxor.u32 %v1181, 2147483648
        %v1240 = vxor.u32 %v1186, 2147483648
        %v1241 = vxor.u32 %v1191, 2147483648
        %v1242 = vxor.u32 %v1196, 2147483648
        %v1243 = vxor.u32 %v1201, 2147483648
        %v1244 = vxor.u32 %v1206, 2147483648
        %v1245 = vxor.u32 %v1211, 2147483648
        %v1246 = vxor.u32 %v1216, 2147483648
        %v1247 = vxor.u32 %v1221, 2147483648
        %v1248 = vxor.u32 %v1226, 2147483648
        %v1249 = vxor.u32 %v1231, 2147483648
        %v1250 = vmul.f32 %v1234, 1.442695
        %v1251 = vpow.pop %v1250
        %v1252 = vmul.f32 %v1235, 1.442695
        %v1253 = vpow.pop %v1252
        %v1254 = vmul.f32 %v1236, 1.442695
        %v1255 = vpow.pop %v1254
        %v1256 = vmul.f32 %v1237, 1.442695
        %v1257 = vpow.pop %v1256
        %v1258 = vmul.f32 %v1238, 1.442695
        %v1259 = vpow.pop %v1258
        %v1260 = vmul.f32 %v1239, 1.442695
        %v1261 = vpow.pop %v1260
        %v1262 = vmul.f32 %v1240, 1.442695
        %v1263 = vpow.pop %v1262
        %v1264 = vmul.f32 %v1241, 1.442695
        %v1265 = vpow.pop %v1264
        %v1266 = vmul.f32 %v1242, 1.442695
        %v1267 = vpow.pop %v1266
        %v1268 = vmul.f32 %v1243, 1.442695
        %v1269 = vpow.pop %v1268
        %v1270 = vmul.f32 %v1244, 1.442695
        %v1271 = vpow.pop %v1270
        %v1272 = vmul.f32 %v1245, 1.442695
        %v1273 = vpow.pop %v1272
        %v1274 = vmul.f32 %v1246, 1.442695
        %v1275 = vpow.pop %v1274
        %v1276 = vmul.f32 %v1247, 1.442695
        %v1277 = vpow.pop %v1276
        %v1278 = vmul.f32 %v1248, 1.442695
        %v1279 = vpow.pop %v1278
        %v1280 = vmul.f32 %v1249, 1.442695
        %v1281 = vpow.pop %v1280
        %v1282 = vadd.f32 %v1251, 1.0
        %v1283 = vadd.f32 %v1253, 1.0
        %v1284 = vadd.f32 %v1255, 1.0
        %v1285 = vadd.f32 %v1257, 1.0
        %v1286 = vadd.f32 %v1259, 1.0
        %v1287 = vadd.f32 %v1261, 1.0
        %v1288 = vadd.f32 %v1263, 1.0
        %v1289 = vadd.f32 %v1265, 1.0
        %v1290 = vadd.f32 %v1267, 1.0
        %v1291 = vadd.f32 %v1269, 1.0
        %v1292 = vadd.f32 %v1271, 1.0
        %v1293 = vadd.f32 %v1273, 1.0
        %v1294 = vadd.f32 %v1275, 1.0
        %v1295 = vadd.f32 %v1277, 1.0
        %v1296 = vadd.f32 %v1279, 1.0
        %v1297 = vadd.f32 %v1281, 1.0
        %v1298 = vrcp.pop %v1282
        %v1299 = vmul.f32 1.0, %v1298
        %v1300 = vrcp.pop %v1283
        %v1301 = vmul.f32 1.0, %v1300
        %v1302 = vrcp.pop %v1284
        %v1303 = vmul.f32 1.0, %v1302
        %v1304 = vrcp.pop %v1285
        %v1305 = vmul.f32 1.0, %v1304
        %v1306 = vrcp.pop %v1286
        %v1307 = vmul.f32 1.0, %v1306
        %v1308 = vrcp.pop %v1287
        %v1309 = vmul.f32 1.0, %v1308
        %v1310 = vrcp.pop %v1288
        %v1311 = vmul.f32 1.0, %v1310
        %v1312 = vrcp.pop %v1289
        %v1313 = vmul.f32 1.0, %v1312
        %v1314 = vrcp.pop %v1290
        %v1315 = vmul.f32 1.0, %v1314
        %v1316 = vrcp.pop %v1291
        %v1317 = vmul.f32 1.0, %v1316
        %v1318 = vrcp.pop %v1292
        %v1319 = vmul.f32 1.0, %v1318
        %v1320 = vrcp.pop %v1293
        %v1321 = vmul.f32 1.0, %v1320
        %v1322 = vrcp.pop %v1294
        %v1323 = vmul.f32 1.0, %v1322
        %v1324 = vrcp.pop %v1295
        %v1325 = vmul.f32 1.0, %v1324
        %v1326 = vrcp.pop %v1296
        %v1327 = vmul.f32 1.0, %v1326
        %v1328 = vrcp.pop %v1297
        %v1329 = vmul.f32 1.0, %v1328
        %v1330 = vmul.f32 %v844, %v1299
        %v1331 = vmul.f32 %v845, %v1301
        %v1332 = vmul.f32 %v846, %v1303
        %v1333 = vmul.f32 %v847, %v1305
        %v1334 = vmul.f32 %v848, %v1307
        %v1335 = vmul.f32 %v849, %v1309
        %v1336 = vmul.f32 %v850, %v1311
        %v1337 = vmul.f32 %v851, %v1313
        %v1338 = vmul.f32 %v852, %v1315
        %v1339 = vmul.f32 %v853, %v1317
        %v1340 = vmul.f32 %v854, %v1319
        %v1341 = vmul.f32 %v855, %v1321
        %v1342 = vmul.f32 %v856, %v1323
        %v1343 = vmul.f32 %v857, %v1325
        %v1344 = vmul.f32 %v858, %v1327
        %v1345 = vmul.f32 %v859, %v1329
        %1346 = vst.msk [vmem:[%s406] sm:$0xff] %vm450, %v1330
        %1347 = vst.msk [vmem:[%s406 + $0x8] sm:$0xff] %vm450, %v1331
        %1348 = vst.msk [vmem:[%s406 + $0x10] sm:$0xff] %vm450, %v1332
        %1349 = vst.msk [vmem:[%s406 + $0x18] sm:$0xff] %vm450, %v1333
        %1350 = vst.msk [vmem:[%s406 + $0x20] sm:$0xff] %vm450, %v1334
        %1351 = vst.msk [vmem:[%s406 + $0x28] sm:$0xff] %vm450, %v1335
        %1352 = vst.msk [vmem:[%s406 + $0x30] sm:$0xff] %vm450, %v1336
        %1353 = vst.msk [vmem:[%s406 + $0x38] sm:$0xff] %vm450, %v1337
        %1354 = vst.msk [vmem:[%s406 + $0x40] sm:$0xff] %vm450, %v1338
        %1355 = vst.msk [vmem:[%s406 + $0x48] sm:$0xff] %vm450, %v1339
        %1356 = vst.msk [vmem:[%s406 + $0x50] sm:$0xff] %vm450, %v1340
        %1357 = vst.msk [vmem:[%s406 + $0x58] sm:$0xff] %vm450, %v1341
        %1358 = vst.msk [vmem:[%s406 + $0x60] sm:$0xff] %vm450, %v1342
        %1359 = vst.msk [vmem:[%s406 + $0x68] sm:$0xff] %vm450, %v1343
        %1360 = vst.msk [vmem:[%s406 + $0x70] sm:$0xff] %vm450, %v1344
        %1361 = vst.msk [vmem:[%s406 + $0x78] sm:$0xff] %vm450, %v1345
        %s1362 = sand.u32 %s194, 1
        %s1363 = scalar_lea.sflag [#allocation4], %s1362
        %s1364 = sand.u32 %s194, 1
        %s1365 = smul.addr %s1364, 128
        %s1366 = scalar_lea.vmem [#allocation14], %s1365
        // Predicated region
        $region77: #{concat_dense_se.1} parent=47 // pred_check
          %p1367 = pneg %p204
        $region78: #{concat_dense_se.1} parent=47 // pred_check_branch
          %1369 = sbr.rel (%p1367) target = $region80
        $region79: #{concat_dense_se.1} parent=47 // pred_region
          %s1370 = smul.u32 16, %s29
          %s1372 = ssub.s32 2048, 2048
          %1373 = vsyncadd %s1363, %s1372
          %s1374 = smul.addr %s1370, 128
          %s1375 = scalar_lea.hbm %s7, %s1374
          %s1376 = sshll.u32 %s1366, 4
          %s1377 = int_to_ptr.vmem [resolvable:$true] %s1376
          %1382 = dma.vmem_to_hbm [thread:$0]  %s1377, 2048, %s1375, %s1363, 128, 128, 8
        $region80: #{concat_dense_se.1} parent=47 // pred_fallthru
          _
      $region48: #{concat_dense_se.1} parent=5 // pred_fallthru
        _
      %p1383 = scmp.le.s32.totalorder 2, %s24
      // Predicated region
      $region81: #{concat_dense_se.1} parent=5 // pred_check
        %p1384 = pneg %p1383
      $region82: #{concat_dense_se.1} parent=5 // pred_check_branch
        %1386 = sbr.rel (%p1384) target = $region84
      $region83: #{concat_dense_se.1} parent=5 // pred_region
        %s1387 = ssub.s32 %s24, 2
        // Predicated region
        $region85: #{concat_dense_se.1} parent=83 // pred_check
          %p1388 = pneg %p210
        $region86: #{concat_dense_se.1} parent=83 // pred_check_branch
          %1390 = sbr.rel (%p1388) target = $region88
        $region87: #{concat_dense_se.1} parent=83 // pred_region
          %s1391 = sand.u32 %s195, 1
          %s1392 = scalar_lea.sflag [#allocation4], %s1391
          %s1393 = sand.u32 %s195, 1
          %s1394 = smul.addr %s1393, 128
          %s1395 = scalar_lea.vmem [#allocation14], %s1394
          %1396 = dma.done %s1392, 2048
        $region88: #{concat_dense_se.1} parent=83 // pred_fallthru
          _
      $region84: #{concat_dense_se.1} parent=5 // pred_fallthru
        _
    $region6: #{concat_dense_se.1} parent=1 // loop_footer
      %s28 = sadd.s32 1, %s24
    $region7: #{concat_dense_se.1} parent=1 // loop_footer_branch
      %23 = sbr.rel target = $region3
    $region8: #{concat_dense_se.1} parent=1 // loop_exit
      _
    %1397 = vsyncpa [#allocation3], 1
    %s1398 = scalar_lea.sflag [#allocation3], 1
    %1399 = vsyncpa %s1398, 1
    %1400 = vsyncpa [#allocation6], 1
    %s1401 = scalar_lea.sflag [#allocation6], 1
    %1402 = vsyncpa %s1401, 1
    %1403 = vsyncpa [#allocation9], 1
    %1404 = vsyncpa [#allocation12], 1
    %1405 = vsyncpa [#allocation4], 1
    %s1406 = scalar_lea.sflag [#allocation4], 1
    %1407 = vsyncpa %s1406, 1

</llo_original>
